<compile_context>
chip_gen: v5e
topology: v5e:2x2
jax: 0.10.0
libtpu: 0.0.40
codegen_flags: <defaults>
</compile_context>

<pallas_src>
import jax
import jax.numpy as jnp
from jax.experimental import pallas as pl
from jax.experimental.pallas import tpu as pltpu

N_ACTIONS = 8
N_INPUTS = 9

_H1, _H2, _H3 = 64, 128, 64
_MAX_TILE_B = 2048   # (2048, 128)-padded f32 block ~1 MiB; VMEM is a non-issue.
_B1_ROW = 16         # sublane-tile-aligned row holding b1 in the w1b buffer.


def _round_up(n, m):
    return ((n + m - 1) // m) * m


def _mlp_kernel(x_ref, w1b_ref, wb2_ref, wb3_ref, o_ref):
    # Layer 1: W1 in rows 0..8, b1 in row _B1_ROW (bias added in-kernel; no
    # wrapper-side augmented input).
    x = x_ref[...]                                            # (TB, 9)
    h1 = jnp.maximum(
        jnp.dot(x, w1b_ref[0:N_INPUTS, :], preferred_element_type=jnp.float32)
        + w1b_ref[_B1_ROW:_B1_ROW + 1, :],
        0.0,
    )                                                         # (TB, 64)

    # Layer 2: rows 0..63 = W2, row 64 = b2 (single resident buffer).
    h2 = jnp.maximum(
        jnp.dot(h1, wb2_ref[0:_H1, :], preferred_element_type=jnp.float32)
        + wb2_ref[_H1:_H1 + 1, :],
        0.0,
    )                                                         # (TB, 128)

    # Layer 3: rows 0..127 = W3, row 128 = b3.  True 64-wide output (no lane
    # padding); masked 64-lane stores are far cheaper than 2x write bytes.
    h3 = jnp.maximum(
        jnp.dot(h2, wb3_ref[0:_H2, :], preferred_element_type=jnp.float32)
        + wb3_ref[_H2:_H2 + 1, :],
        0.0,
    )                                                         # (TB, 64)
    o_ref[...] = h3.astype(o_ref.dtype)


def pack_params(params):
    """Pack (w1,b1,w2,b2,w3,b3) [w stored (in,out)] into 3 kernel buffers."""
    w1, b1, w2, b2, w3, b3 = params
    # Layer 1: rows 0..8 = W1, row 16 = b1 (aligned), rest zero.
    w1b = jnp.zeros((24, _H1), jnp.float32)
    w1b = w1b.at[:N_INPUTS, :].set(w1)
    w1b = w1b.at[_B1_ROW, :].set(b1)
    # Layer 2: weight rows 0..63, bias row 64, sublane-pad to 72 rows.
    wb2 = jnp.zeros((72, _H2), jnp.float32)
    wb2 = wb2.at[:_H1, :].set(w2)
    wb2 = wb2.at[_H1, :].set(b2)
    # Layer 3: weight rows 0..127, bias row 128, sublane-pad to 136 rows.
    # Output stays 64 lanes wide (no lane padding).
    wb3 = jnp.zeros((136, _H3), jnp.float32)
    wb3 = wb3.at[:_H2, :].set(w3)
    wb3 = wb3.at[_H2, :].set(b3)
    return w1b, wb2, wb3


def actor_critic_forward(x, packed_params, *, max_tile_b=_MAX_TILE_B):
    """Pallas implementation of ActorCritic.forward(x). x: (B, N_INPUTS)."""
    w1b, wb2, wb3 = packed_params
    B = x.shape[0]
    x = x.astype(jnp.float32)

    # Tile selection: near-minimal padding (< 8 wasted rows per tile).  For
    # large batches force an even tile count so v7x's two TensorCores get
    # balanced "parallel" work; harmless on single-TC v5e/v6e.
    n_tiles = max(1, pl.cdiv(B, max_tile_b))
    if B >= 256 and n_tiles % 2 == 1:
        n_tiles += 1
    tb = _round_up(pl.cdiv(B, n_tiles), 8)
    b_pad = n_tiles * tb

    if b_pad != B:
        x = jnp.pad(x, ((0, b_pad - B), (0, 0)))

    flops = 2 * b_pad * (N_INPUTS * _H1 + _H1 * _H2 + _H2 * _H3)
    bytes_accessed = 4 * (
        b_pad * N_INPUTS + b_pad * _H3 + w1b.size + wb2.size + wb3.size
    )

    out = pl.pallas_call(
        _mlp_kernel,
        out_shape=jax.ShapeDtypeStruct((b_pad, _H3), jnp.float32),
        grid=(n_tiles,),
        in_specs=[
            pl.BlockSpec((tb, N_INPUTS), lambda i: (i, 0)),   # x tile
            pl.BlockSpec((24, _H1), lambda i: (0, 0)),        # resident weights
            pl.BlockSpec((72, _H2), lambda i: (0, 0)),
            pl.BlockSpec((136, _H3), lambda i: (0, 0)),
        ],
        out_specs=pl.BlockSpec((tb, _H3), lambda i: (i, 0)),
        compiler_params=pltpu.CompilerParams(
            dimension_semantics=("parallel",),
        ),
        cost_estimate=pl.CostEstimate(
            flops=flops, transcendentals=0, bytes_accessed=bytes_accessed
        ),
    )(x, w1b, wb2, wb3)

    return out[:B] if b_pad != B else out


def init_params(key):
    """PyTorch-nn.Linear-style init; weights stored transposed as (in, out)."""
    dims = [(N_INPUTS, _H1), (_H1, _H2), (_H2, _H3)]
    params = []
    for fan_in, fan_out in dims:
        key, kw, kb = jax.random.split(key, 3)
        bound = 1.0 / jnp.sqrt(fan_in)
        w = jax.random.uniform(kw, (fan_in, fan_out), jnp.float32, -bound, bound)
        b = jax.random.uniform(kb, (fan_out,), jnp.float32, -bound, bound)
        params += [w, b]
    return tuple(params)


def _reference_forward(x, params):
    w1, b1, w2, b2, w3, b3 = params
    h = jnp.maximum(x @ w1 + b1, 0.0)
    h = jnp.maximum(h @ w2 + b2, 0.0)
    h = jnp.maximum(h @ w3 + b3, 0.0)
    return h


# TODO(synk): actor/critic heads + softmax (get_action_probs / get_state_value)
# are not part of forward() and are intentionally not fused into this kernel.

if __name__ == "__main__":
    key = jax.random.PRNGKey(0)
    key, kx1, kx2 = jax.random.split(key, 3)

    params = init_params(key)
    packed = pack_params(params)

    # Small batch (single tile, grid of 1).
    x_small = jax.random.normal(kx1, (4, N_INPUTS), dtype=jnp.float32)
    out_small = jax.block_until_ready(actor_critic_forward(x_small, packed))
    ref_small = _reference_forward(x_small, params)
    assert out_small.shape == (4, _H3)
    assert jnp.allclose(out_small, ref_small, atol=1e-5, rtol=1e-5)

    # Larger, ragged batch: exercises even-tile split (2 balanced tiles) and
    # the minimal (<8 rows/tile) batch-padding path.
    x_big = jax.random.normal(kx2, (600, N_INPUTS), dtype=jnp.float32)
    out_big = jax.block_until_ready(actor_critic_forward(x_big, packed))
    ref_big = _reference_forward(x_big, params)
    assert out_big.shape == (600, _H3)
    assert jnp.allclose(out_big, ref_big, atol=1e-5, rtol=1e-5)

    print("KERNEL_OK")
</pallas_src>

<mosaic_0001>
module attributes {stable_mosaic.version = 11 : i64} {
  func.func @_mlp_kernel(%arg0: i32, %arg1: memref<8x9xf32, #tpu.memory_space<vmem>>, %arg2: memref<24x64xf32, #tpu.memory_space<vmem>>, %arg3: memref<72x128xf32, #tpu.memory_space<vmem>>, %arg4: memref<136x64xf32, #tpu.memory_space<vmem>>, %arg5: memref<8x64xf32, #tpu.memory_space<vmem>>) attributes {dimension_semantics = [#tpu.dimension_semantics<parallel>], iteration_bounds = array<i64: 1>, scalar_prefetch = 0 : i64, scratch_operands = 0 : i64, tpu.core_type = #tpu.core_type<tc>, window_params = [{transform_indices = @transform_0, window_bounds = array<i64: 8, 9>}, {pipeline_mode = #tpu.pipeline_mode<synchronous>, transform_indices = @transform_1, window_bounds = array<i64: 24, 64>}, {pipeline_mode = #tpu.pipeline_mode<synchronous>, transform_indices = @transform_2, window_bounds = array<i64: 72, 128>}, {pipeline_mode = #tpu.pipeline_mode<synchronous>, transform_indices = @transform_3, window_bounds = array<i64: 136, 64>}, {transform_indices = @transform_4, window_bounds = array<i64: 8, 64>}]} {
    %c0 = arith.constant 0 : index
    %c0_0 = arith.constant 0 : index
    %0 = vector.load %arg1[%c0, %c0_0] : memref<8x9xf32, #tpu.memory_space<vmem>>, vector<8x9xf32>
    %c0_1 = arith.constant 0 : index
    %c0_2 = arith.constant 0 : index
    %1 = vector.load %arg2[%c0_1, %c0_2] : memref<24x64xf32, #tpu.memory_space<vmem>>, vector<9x64xf32>
    %cst = arith.constant dense<0.000000e+00> : vector<8x64xf32>
    %2 = tpu.matmul %0, %1, %cst {dimension_numbers = #tpu.dot_dimension_numbers<[1], [0], [0], [1], [0, 0, 1, 1], [], []>} : vector<8x9xf32>, vector<9x64xf32>, vector<8x64xf32> -> vector<8x64xf32>
    %c16 = arith.constant 16 : index
    %c0_3 = arith.constant 0 : index
    %3 = vector.load %arg2[%c16, %c0_3] : memref<24x64xf32, #tpu.memory_space<vmem>>, vector<1x64xf32>
    %4 = vector.broadcast %3 : vector<1x64xf32> to vector<8x64xf32>
    %5 = arith.addf %2, %4 : vector<8x64xf32>
    %cst_4 = arith.constant 0.000000e+00 : f32
    %6 = vector.broadcast %cst_4 : f32 to vector<8x64xf32>
    %7 = arith.maximumf %5, %6 : vector<8x64xf32>
    %c0_5 = arith.constant 0 : index
    %c0_6 = arith.constant 0 : index
    %8 = vector.load %arg3[%c0_5, %c0_6] : memref<72x128xf32, #tpu.memory_space<vmem>>, vector<64x128xf32>
    %cst_7 = arith.constant dense<0.000000e+00> : vector<8x128xf32>
    %9 = tpu.matmul %7, %8, %cst_7 {dimension_numbers = #tpu.dot_dimension_numbers<[1], [0], [0], [1], [0, 0, 1, 1], [], []>} : vector<8x64xf32>, vector<64x128xf32>, vector<8x128xf32> -> vector<8x128xf32>
    %c64 = arith.constant 64 : index
    %c0_8 = arith.constant 0 : index
    %10 = vector.load %arg3[%c64, %c0_8] : memref<72x128xf32, #tpu.memory_space<vmem>>, vector<1x128xf32>
    %11 = vector.broadcast %10 : vector<1x128xf32> to vector<8x128xf32>
    %12 = arith.addf %9, %11 : vector<8x128xf32>
    %cst_9 = arith.constant 0.000000e+00 : f32
    %13 = vector.broadcast %cst_9 : f32 to vector<8x128xf32>
    %14 = arith.maximumf %12, %13 : vector<8x128xf32>
    %c0_10 = arith.constant 0 : index
    %c0_11 = arith.constant 0 : index
    %15 = vector.load %arg4[%c0_10, %c0_11] : memref<136x64xf32, #tpu.memory_space<vmem>>, vector<128x64xf32>
    %cst_12 = arith.constant dense<0.000000e+00> : vector<8x64xf32>
    %16 = tpu.matmul %14, %15, %cst_12 {dimension_numbers = #tpu.dot_dimension_numbers<[1], [0], [0], [1], [0, 0, 1, 1], [], []>} : vector<8x128xf32>, vector<128x64xf32>, vector<8x64xf32> -> vector<8x64xf32>
    %c128 = arith.constant 128 : index
    %c0_13 = arith.constant 0 : index
    %17 = vector.load %arg4[%c128, %c0_13] : memref<136x64xf32, #tpu.memory_space<vmem>>, vector<1x64xf32>
    %18 = vector.broadcast %17 : vector<1x64xf32> to vector<8x64xf32>
    %19 = arith.addf %16, %18 : vector<8x64xf32>
    %cst_14 = arith.constant 0.000000e+00 : f32
    %20 = vector.broadcast %cst_14 : f32 to vector<8x64xf32>
    %21 = arith.maximumf %19, %20 : vector<8x64xf32>
    %c0_15 = arith.constant 0 : index
    %c0_16 = arith.constant 0 : index
    %22 = vector.load %arg5[%c0_15, %c0_16] : memref<8x64xf32, #tpu.memory_space<vmem>>, vector<8x64xf32>
    tpu.vector_store %arg5[%c0_15, %c0_16], %21 {strides = array<i32>} : memref<8x64xf32, #tpu.memory_space<vmem>>, vector<8x64xf32>,
    return
  }
  func.func @transform_0(%arg0: i32) -> (i32, i32) {
    %c0_i32 = arith.constant 0 : i32
    %c0_i32_0 = arith.constant 0 : i32
    return %arg0, %c0_i32 : i32, i32
  }
  func.func @transform_1(%arg0: i32) -> (i32, i32) {
    %c0_i32 = arith.constant 0 : i32
    %c0_i32_0 = arith.constant 0 : i32
    %c0_i32_1 = arith.constant 0 : i32
    return %c0_i32, %c0_i32_0 : i32, i32
  }
  func.func @transform_2(%arg0: i32) -> (i32, i32) {
    %c0_i32 = arith.constant 0 : i32
    %c0_i32_0 = arith.constant 0 : i32
    %c0_i32_1 = arith.constant 0 : i32
    return %c0_i32, %c0_i32_0 : i32, i32
  }
  func.func @transform_3(%arg0: i32) -> (i32, i32) {
    %c0_i32 = arith.constant 0 : i32
    %c0_i32_0 = arith.constant 0 : i32
    %c0_i32_1 = arith.constant 0 : i32
    return %c0_i32, %c0_i32_0 : i32, i32
  }
  func.func @transform_4(%arg0: i32) -> (i32, i32) {
    %c0_i32 = arith.constant 0 : i32
    %c0_i32_0 = arith.constant 0 : i32
    return %arg0, %c0_i32 : i32, i32
  }
}

</mosaic_0001>

<llo_original>
// kernel: tpu_custom_call.1
$region0: #{tpu_custom_call.1}
  #allocation0 [shape = 'u32[]', space=smem, size = 0x4, offset = 0x4, fixed_abs, tag = 'smem constant byte address 0x4 - core index']
  #allocation1 [shape = 'u32[72,128]{1,0:T(1,128)}', space=vmem, size = 0x9000, scoped, tag = 'internal scratch']
  %s0 = inlined_call_operand.vmem [shape: f32[8,9], index: 0, kind: input, shape index: {}]
  %s1 = inlined_call_operand.vmem [shape: f32[24,64], index: 1, kind: input, shape index: {}]
  %s2 = inlined_call_operand.vmem [shape: f32[72,128], index: 2, kind: input, shape index: {}]
  %s3 = inlined_call_operand.vmem [shape: f32[136,64], index: 3, kind: input, shape index: {}]
  %s4 = inlined_call_operand.hbm [shape: f32[8,64], index: 4, kind: output, shape index: {}]
  %s5 = sld [smem:[#allocation0]]
  $region26: #{tpu_custom_call.1} parent=0
    _
  %s7 = ssub.s32 1, %s5
  %s8 = scalar_select 0, %s7, %s5
  $region1: #{tpu_custom_call.1} parent=0
    #allocation2 [shape = 'u8[4096]{0}', space=vmem, size = 0x1000, scoped, tag = 'output window, operand 0, single buffered']
    #allocation3 [shape = 's32[1]{0}', space=sflag, size = 0x4, scoped, tag = 'scoped memory for tpu_custom_call.1']
    %9 = vsyncpa [#allocation3], 0
    // Predicated region
    $region2: #{tpu_custom_call.1} parent=1 // pred_check
      _
    $region3: #{tpu_custom_call.1} parent=1 // pred_check_branch
      %11 = sbr.rel (0) target = $region5
    $region4: #{tpu_custom_call.1} parent=1 // pred_region
      _
    $region5: #{tpu_custom_call.1} parent=1 // pred_fallthru
      _
    // Predicated region
    $region6: #{tpu_custom_call.1} parent=1 // pred_check
      _
    $region7: #{tpu_custom_call.1} parent=1 // pred_check_branch
      %13 = sbr.rel (0) target = $region9
    $region8: #{tpu_custom_call.1} parent=1 // pred_region
      _
    $region9: #{tpu_custom_call.1} parent=1 // pred_fallthru
      _
    // Predicated region
    $region10: #{tpu_custom_call.1} parent=1 // pred_check
      _
    $region11: #{tpu_custom_call.1} parent=1 // pred_check_branch
      %15 = sbr.rel (0) target = $region13
    $region12: #{tpu_custom_call.1} parent=1 // pred_region
      _
    $region13: #{tpu_custom_call.1} parent=1 // pred_fallthru
      _
    // Predicated region
    $region14: #{tpu_custom_call.1} parent=1 // pred_check
      _
    $region15: #{tpu_custom_call.1} parent=1 // pred_check_branch
      %17 = sbr.rel (0) target = $region17
    $region16: #{tpu_custom_call.1} parent=1 // pred_region
      _
    $region17: #{tpu_custom_call.1} parent=1 // pred_fallthru
      _
    %v18 = vld [vmem:[%s0] sm:$0xff]
    %v19 = vld [vmem:[%s1] sm:$0xff]
    %v20 = vld [vmem:[%s1 + $0x8] sm:$0x1]
    %v21 = vld [vmem:[%s1 + $0x10] sm:$0x1]
    %v22 = vperm.slane %v21, 0
    %vm23 = vcmask 72704
    %v25 = vsel %vm23, %v18, 0
    %vm27 = vcmask 1040384
    %v29 = vsel %vm27, %v20, 0
    %31 = vmatpush.msra.mxu0 0.0
    %32 = vmatpush.msra.mxu0 0.0
    %33 = vmatpush.msra.mxu0 0.0
    %34 = vmatpush.msra.mxu0 0.0
    %35 = vmatpush.msra.mxu0 0.0
    %36 = vmatpush.msra.mxu0 0.0
    %37 = vmatpush.msra.mxu0 0.0
    %38 = vmatpush.msra.mxu0 0.0
    %39 = vmatpush.msra.mxu0 0.0
    %40 = vmatpush.msra.mxu0 0.0
    %41 = vmatpush.msra.mxu0 0.0
    %42 = vmatpush.msra.mxu0 0.0
    %43 = vmatpush.msra.mxu0 0.0
    %44 = vmatpush.msra.mxu0 0.0
    %45 = vmatpush.msra.mxu0 %v29
    %46 = vmatpush.msra.mxu0 %v19
    %47 = vmatmul.f32.gmra.mxu0 %v25
    %v48 = vpop.f32.mrf.mxu0
    %v49 = vadd.f32 %v22, %v48
    %50 = vdwg.mxu0
    %v51 = vmax.f32 %v49, 0.0
    %v52 = vld [vmem:[%s2] sm:$0xff]
    %v53 = vld [vmem:[%s2 + $0x8] sm:$0xff]
    %v54 = vld [vmem:[%s2 + $0x10] sm:$0xff]
    %v55 = vld [vmem:[%s2 + $0x18] sm:$0xff]
    %v56 = vld [vmem:[%s2 + $0x20] sm:$0xff]
    %v57 = vld [vmem:[%s2 + $0x28] sm:$0xff]
    %v58 = vld [vmem:[%s2 + $0x30] sm:$0xff]
    %v59 = vld [vmem:[%s2 + $0x38] sm:$0xff]
    %v60 = vld [vmem:[%s2 + $0x40] sm:$0x1]
    %v61 = vperm.slane %v60, 0
    %vm62 = vcmask 523264
    %v64 = vsel %vm62, %v51, 0
    %66 = vmatpush.msra.mxu0 0.0
    %67 = vmatpush.msra.mxu0 0.0
    %68 = vmatpush.msra.mxu0 0.0
    %69 = vmatpush.msra.mxu0 0.0
    %70 = vmatpush.msra.mxu0 0.0
    %71 = vmatpush.msra.mxu0 0.0
    %72 = vmatpush.msra.mxu0 0.0
    %73 = vmatpush.msra.mxu0 0.0
    %74 = vmatpush.msra.mxu0 %v59
    %75 = vmatpush.msra.mxu0 %v58
    %76 = vmatpush.msra.mxu0 %v57
    %77 = vmatpush.msra.mxu0 %v56
    %78 = vmatpush.msra.mxu0 %v55
    %79 = vmatpush.msra.mxu0 %v54
    %80 = vmatpush.msra.mxu0 %v53
    %81 = vmatpush.msra.mxu0 %v52
    %82 = vmatmul.f32.gmra.mxu0 %v64
    %v83 = vpop.f32.mrf.mxu0
    %v84 = vadd.f32 %v61, %v83
    %85 = vdwg.mxu0
    %v86 = vmax.f32 %v84, 0.0
    %v87 = vld [vmem:[%s3] sm:$0xff]
    %v88 = vld [vmem:[%s3 + $0x8] sm:$0xff]
    %v89 = vld [vmem:[%s3 + $0x10] sm:$0xff]
    %v90 = vld [vmem:[%s3 + $0x18] sm:$0xff]
    %v91 = vld [vmem:[%s3 + $0x20] sm:$0xff]
    %v92 = vld [vmem:[%s3 + $0x28] sm:$0xff]
    %v93 = vld [vmem:[%s3 + $0x30] sm:$0xff]
    %v94 = vld [vmem:[%s3 + $0x38] sm:$0xff]
    %v95 = vld [vmem:[%s3 + $0x40] sm:$0xff]
    %v96 = vld [vmem:[%s3 + $0x48] sm:$0xff]
    %v97 = vld [vmem:[%s3 + $0x50] sm:$0xff]
    %v98 = vld [vmem:[%s3 + $0x58] sm:$0xff]
    %v99 = vld [vmem:[%s3 + $0x60] sm:$0xff]
    %v100 = vld [vmem:[%s3 + $0x68] sm:$0xff]
    %v101 = vld [vmem:[%s3 + $0x70] sm:$0xff]
    %v102 = vld [vmem:[%s3 + $0x78] sm:$0xff]
    %v103 = vld [vmem:[%s3 + $0x80] sm:$0x1]
    %v104 = vperm.slane %v103, 0
    %105 = vmatpush.msra.mxu0 %v102
    %106 = vmatpush.msra.mxu0 %v101
    %107 = vmatpush.msra.mxu0 %v100
    %108 = vmatpush.msra.mxu0 %v99
    %109 = vmatpush.msra.mxu0 %v98
    %110 = vmatpush.msra.mxu0 %v97
    %111 = vmatpush.msra.mxu0 %v96
    %112 = vmatpush.msra.mxu0 %v95
    %113 = vmatpush.msra.mxu0 %v94
    %114 = vmatpush.msra.mxu0 %v93
    %115 = vmatpush.msra.mxu0 %v92
    %116 = vmatpush.msra.mxu0 %v91
    %117 = vmatpush.msra.mxu0 %v90
    %118 = vmatpush.msra.mxu0 %v89
    %119 = vmatpush.msra.mxu0 %v88
    %120 = vmatpush.msra.mxu0 %v87
    %121 = vmatmul.f32.gmra.mxu0 %v86
    %v122 = vpop.f32.mrf.mxu0
    %v123 = vadd.f32 %v104, %v122
    %124 = vdwg.mxu0
    %v125 = vmax.f32 %v123, 0.0
    %126 = vst.msk [vmem:[#allocation2] sm:$0xff] %vm62, %v125
    // Predicated region
    $region18: #{tpu_custom_call.1} parent=1 // pred_check
      _
    $region19: #{tpu_custom_call.1} parent=1 // pred_check_branch
      %128 = sbr.rel (0) target = $region21
    $region20: #{tpu_custom_call.1} parent=1 // pred_region
      %130 = vsyncadd [#allocation3], 0
      %s132 = sshll.u32 [#allocation2], 4
      %s133 = int_to_ptr.vmem [resolvable:$true] %s132
      %s134 = sshll.u32 %s4, 4
      %s135 = int_to_ptr.hbm [resolvable:$true] %s134
      %137 = dma.vmem_to_hbm [thread:$0]  %s133, 128, %s135, [#allocation3]
    $region21: #{tpu_custom_call.1} parent=1 // pred_fallthru
      _
    // Predicated region
    $region22: #{tpu_custom_call.1} parent=1 // pred_check
      _
    $region23: #{tpu_custom_call.1} parent=1 // pred_check_branch
      %139 = sbr.rel (0) target = $region25
    $region24: #{tpu_custom_call.1} parent=1 // pred_region
      %141 = dma.done [#allocation3], 128
    $region25: #{tpu_custom_call.1} parent=1 // pred_fallthru
      _
    %142 = vsyncpa [#allocation3], 1

</llo_original>
